<compile_context>
chip_gen: v7x
topology: tpu7x:2x2x1
jax: 0.10.0
libtpu: 0.0.40
codegen_flags: <defaults>
</compile_context>

<pallas_src>
import jax
import jax.numpy as jnp
from jax import lax
from jax.experimental import pallas as pl
from jax.experimental.pallas import tpu as pltpu

LANE = 128
VMEM_LIMIT = 48 * 1024 * 1024  # explicit scoped-VMEM limit; safe on v5e/v6e/v7x


def _round_up(x, m):
    return ((x + m - 1) // m) * m


def _pad2d(x, rows, cols):
    r, c = x.shape
    if r == rows and c == cols:
        return x
    return jnp.pad(x, ((0, rows - r), (0, cols - c)))


def _pick_tile(n_pad, cap):
    """Largest multiple of 256 <= cap that divides n_pad (n_pad is a mult of 256)."""
    t = min(n_pad, cap)
    while n_pad % t:
        t -= 256
    return t


# ----------------------------- Pallas kernels ------------------------------


def _linear_kernel(x_ref, w_ref, b_ref, o_ref):
    # H = X @ W_all + b_all  (bf16 MXU inputs, f32 accumulate + bias, bf16 store
    # so the downstream adjacency matmuls feed the MXU in bf16).
    h = jnp.dot(x_ref[...], w_ref[...], preferred_element_type=jnp.float32)
    h = h + b_ref[...]
    o_ref[...] = h.astype(o_ref.dtype)


def fused_linear(x_pad, w_all, b_all, *, tm):
    """H_all = X @ W_all + b_all for all three layers at once (lane-dense)."""
    n_pad, c_in = x_pad.shape
    h_all = w_all.shape[1]
    return pl.pallas_call(
        _linear_kernel,
        grid=(n_pad // tm,),
        in_specs=[
            pl.BlockSpec((tm, c_in), lambda i: (i, 0)),
            pl.BlockSpec((c_in, h_all), lambda i: (0, 0)),
            pl.BlockSpec((1, h_all), lambda i: (0, 0)),
        ],
        out_specs=pl.BlockSpec((tm, h_all), lambda i: (i, 0)),
        out_shape=jax.ShapeDtypeStruct((n_pad, h_all), jnp.bfloat16),
        compiler_params=pltpu.CompilerParams(dimension_semantics=("parallel",)),
    )(x_pad.astype(jnp.bfloat16), w_all.astype(jnp.bfloat16), b_all)


def _smooth_kernel(a_ref, h_ref, o_ref):
    # Full-width A row-panel @ full H slab (no k-reduction axis, no accumulator).
    acc = jnp.dot(a_ref[...], h_ref[...], preferred_element_type=jnp.float32)
    o_ref[...] = jnp.maximum(acc, 0.0)


def _smooth_dual_kernel(a_ref, h_ref, o_ref, ob_ref):
    # Same as above, plus a bf16 copy of the leading ob_ref.shape[1] columns
    # (the e0 embedding) for direct consumption by the kNN distance kernel.
    acc = jnp.dot(a_ref[...], h_ref[...], preferred_element_type=jnp.float32)
    res = jnp.maximum(acc, 0.0)
    o_ref[...] = res
    ob_ref[...] = res[:, : ob_ref.shape[1]].astype(jnp.bfloat16)


def gcn_smooth(a_bf16, h_bf16, *, tm, bf16_cols=0):
    """ReLU(A_norm @ H): rows-parallel grid, single matmul per step.

    If bf16_cols > 0, also returns a bf16 copy of the first bf16_cols columns.
    """
    n_pad = a_bf16.shape[0]
    width = h_bf16.shape[1]
    grid = (n_pad // tm,)
    in_specs = [
        pl.BlockSpec((tm, n_pad), lambda i: (i, 0)),
        pl.BlockSpec((n_pad, width), lambda i: (0, 0)),
    ]
    cparams = pltpu.CompilerParams(
        dimension_semantics=("parallel",), vmem_limit_bytes=VMEM_LIMIT)
    if bf16_cols:
        return pl.pallas_call(
            _smooth_dual_kernel,
            grid=grid,
            in_specs=in_specs,
            out_specs=[
                pl.BlockSpec((tm, width), lambda i: (i, 0)),
                pl.BlockSpec((tm, bf16_cols), lambda i: (i, 0)),
            ],
            out_shape=[
                jax.ShapeDtypeStruct((n_pad, width), jnp.float32),
                jax.ShapeDtypeStruct((n_pad, bf16_cols), jnp.bfloat16),
            ],
            compiler_params=cparams,
        )(a_bf16, h_bf16)
    return pl.pallas_call(
        _smooth_kernel,
        grid=grid,
        in_specs=in_specs,
        out_specs=pl.BlockSpec((tm, width), lambda i: (i, 0)),
        out_shape=jax.ShapeDtypeStruct((n_pad, width), jnp.float32),
        compiler_params=cparams,
    )(a_bf16, h_bf16)


def _dist2_kernel(e_ref, et_ref, o_ref):
    # Fused gram + squared-distance + diagonal self-exclusion.
    ei = e_ref[...]                      # (tm, c)  bf16
    etj = et_ref[...]                    # (c, tn)  bf16 (pre-transposed in wrapper)
    g = jnp.dot(ei, etj, preferred_element_type=jnp.float32)
    ef = ei.astype(jnp.float32)
    etf = etj.astype(jnp.float32)
    sq_i = jnp.sum(ef * ef, axis=1, keepdims=True)      # (tm, 1)
    sq_j = jnp.sum(etf * etf, axis=0, keepdims=True)    # (1, tn)
    d2 = sq_i + sq_j - 2.0 * g
    tm, tn = o_ref.shape
    row_ids = pl.program_id(0) * tm + lax.broadcasted_iota(jnp.int32, (tm, tn), 0)
    col_ids = pl.program_id(1) * tn + lax.broadcasted_iota(jnp.int32, (tm, tn), 1)
    o_ref[...] = jnp.where(row_ids == col_ids, d2 + 1e9, d2)


def pairwise_dist2(e_bf16, *, tm, tn):
    """Pairwise squared euclidean distances (diagonal excluded with +1e9)."""
    n_pad, c = e_bf16.shape
    e_t = jnp.transpose(e_bf16)          # one wrapper-side layout pass, no in-kernel vxpose
    return pl.pallas_call(
        _dist2_kernel,
        grid=(n_pad // tm, n_pad // tn),
        in_specs=[
            pl.BlockSpec((tm, c), lambda i, j: (i, 0)),
            pl.BlockSpec((c, tn), lambda i, j: (0, j)),
        ],
        out_specs=pl.BlockSpec((tm, tn), lambda i, j: (i, j)),
        out_shape=jax.ShapeDtypeStruct((n_pad, n_pad), jnp.float32),
        compiler_params=pltpu.CompilerParams(
            dimension_semantics=("parallel", "parallel"),
            vmem_limit_bytes=VMEM_LIMIT),
    )(e_bf16, e_t)


# ------------------------------- JAX glue ----------------------------------


def gcn_normalize(adj):
    """A_norm = D^-1/2 (A + I) D^-1/2  (dhg smoothing_with_GCN operator)."""
    n = adj.shape[0]
    a_hat = adj + jnp.eye(n, dtype=adj.dtype)
    deg = jnp.sum(a_hat, axis=1)
    d_inv_sqrt = jnp.where(deg > 0, 1.0 / jnp.sqrt(deg), 0.0)
    return d_inv_sqrt[:, None] * a_hat * d_inv_sqrt[None, :]


def build_knn_adj(dist2_nn, k):
    """kNN graph (euclidean, symmetrized), GCN-normalized. O(kN) scatter."""
    # TODO(synk): getKnnGraph body is not present in the provided module; this
    # reconstructs the standard kNN-graph-from-embeddings behavior.
    n = dist2_nn.shape[0]
    _, idx = lax.top_k(-dist2_nn, k)                          # k nearest per row
    adj = jnp.zeros((n, n), jnp.float32)
    adj = adj.at[jnp.arange(n)[:, None], idx].set(1.0)
    adj = jnp.maximum(adj, adj.T)
    return gcn_normalize(adj)


def get_aug_graph(embedding, a_norm_origin):
    # TODO(synk): getAugGraph body is not present in the provided module; fall
    # back to the original normalized adjacency (no stochastic edge-drop aug).
    # NOTE: the e0/e2 smooth fusion below relies on this stub (same adjacency).
    del embedding
    return a_norm_origin


def multi_gcn_forward(x, a_norm, params, *, c_hid, k=4):
    n, c_in = x.shape
    n_pad = _round_up(n, 256)
    h_pad = _round_up(c_hid, LANE)

    # Stack the three layers' weights into one lane-dense slab, ordered
    # [origin | aug | knn] so the e0/e2 pair is a contiguous 2*h_pad slice.
    def pad_wb(p):
        w = jnp.zeros((c_in, h_pad), jnp.float32).at[:, :c_hid].set(p["w"])
        b = jnp.zeros((1, h_pad), jnp.float32).at[:, :c_hid].set(p["b"])
        return w, b

    w0, b0 = pad_wb(params["origin"])
    w2, b2 = pad_wb(params["aug"])
    w1, b1 = pad_wb(params["knn"])
    w_all = jnp.concatenate([w0, w2, w1], axis=1)    # (c_in, 3*h_pad)
    b_all = jnp.concatenate([b0, b2, b1], axis=1)    # (1,    3*h_pad)

    x_pad = _pad2d(x, n_pad, c_in)
    a0_bf16 = _pad2d(a_norm, n_pad, n_pad).astype(jnp.bfloat16)

    # One fused linear for all three layers (single grid step at these sizes).
    tm_lin = _pick_tile(n_pad, 2048)
    h_all = fused_linear(x_pad, w_all, b_all, tm=tm_lin)       # (n_pad, 3*h_pad) bf16

    tm_sm = _pick_tile(n_pad, 512)

    # aug stub returns the same adjacency => fuse e0 and e2 into ONE smooth:
    # the N^2 adjacency is read from HBM once, output tile is 2*h_pad = 256 wide.
    e02_f32, e0_bf16 = gcn_smooth(
        a0_bf16, h_all[:, : 2 * h_pad], tm=tm_sm, bf16_cols=h_pad)

    # kNN graph from e0 embeddings (fused gram + dist2 kernel, bf16 MXU inputs).
    t_g = _pick_tile(n_pad, 256)
    d2 = pairwise_dist2(e0_bf16, tm=t_g, tn=t_g)[:n, :n]
    knng = build_knn_adj(d2, k)

    # aug graph (stub) — kept for semantic clarity; already fused above.
    _ = get_aug_graph(e02_f32[:n, :c_hid], a_norm)

    knng_bf16 = _pad2d(knng, n_pad, n_pad).astype(jnp.bfloat16)
    e1_f32 = gcn_smooth(knng_bf16, h_all[:, 2 * h_pad:], tm=tm_sm)

    e0 = e02_f32[:n, :c_hid]
    e2 = e02_f32[:n, h_pad:h_pad + c_hid]
    e1 = e1_f32[:n, :c_hid]
    return [e0, e1, e2]


def init_linear(key, in_channels, hid_channels):
    """Deterministic nn.Linear init: U(-1/sqrt(in), 1/sqrt(in)); W stored (in, hid)."""
    kw, kb = jax.random.split(key)
    bound = 1.0 / jnp.sqrt(jnp.float32(in_channels))
    w = jax.random.uniform(kw, (in_channels, hid_channels), jnp.float32, -bound, bound)
    b = jax.random.uniform(kb, (1, hid_channels), jnp.float32, -bound, bound)
    return {"w": w, "b": b}


# --------------------------------- main -------------------------------------

if __name__ == "__main__":
    N, C_IN, C_HID, K = 256, 16, 32, 4
    key = jax.random.PRNGKey(0)
    k_x, k_g, k_o, k_k, k_a = jax.random.split(key, 5)

    # Vertex features X: (N, C_in)
    x = jax.random.normal(k_x, (N, C_IN), jnp.float32)

    # Synthetic undirected graph adjacency (deterministic), zero diagonal.
    r = jax.random.uniform(k_g, (N, N))
    adj = (r < 0.05).astype(jnp.float32)
    adj = jnp.maximum(adj, adj.T) * (1.0 - jnp.eye(N, dtype=jnp.float32))
    a_norm = gcn_normalize(adj)

    params = {
        "origin": init_linear(k_o, C_IN, C_HID),
        "knn": init_linear(k_k, C_IN, C_HID),
        "aug": init_linear(k_a, C_IN, C_HID),
    }

    outs = multi_gcn_forward(x, a_norm, params, c_hid=C_HID, k=K)
    for o in outs:
        jax.block_until_ready(o)

    assert len(outs) == 3 and all(o.shape == (N, C_HID) for o in outs)
    assert all(bool(jnp.all(jnp.isfinite(o))) for o in outs)

    # Lenient correctness check of layer 0 against a pure-f32 XLA reference
    # (bf16 MXU inputs => a small, bounded numerical difference).
    h_ref = x @ params["origin"]["w"] + params["origin"]["b"]
    e0_ref = jnp.maximum(a_norm @ h_ref, 0.0)
    max_err = float(jnp.max(jnp.abs(outs[0] - e0_ref)))
    assert max_err < 0.1, f"e0 mismatch vs reference: max abs err {max_err}"

    # Layer 2 shares the adjacency with layer 0 (aug stub) — check it too.
    h2_ref = x @ params["aug"]["w"] + params["aug"]["b"]
    e2_ref = jnp.maximum(a_norm @ h2_ref, 0.0)
    max_err2 = float(jnp.max(jnp.abs(outs[2] - e2_ref)))
    assert max_err2 < 0.1, f"e2 mismatch vs reference: max abs err {max_err2}"

    print("KERNEL_OK")
</pallas_src>

<mosaic_0001>
module attributes {stable_mosaic.version = 11 : i64} {
  func.func @_linear_kernel(%arg0: i32, %arg1: memref<256x16xbf16, #tpu.memory_space<vmem>>, %arg2: memref<16x384xbf16, #tpu.memory_space<vmem>>, %arg3: memref<1x384xf32, #tpu.memory_space<vmem>>, %arg4: memref<256x384xbf16, #tpu.memory_space<vmem>>) attributes {dimension_semantics = [#tpu.dimension_semantics<parallel>], iteration_bounds = array<i64: 1>, scalar_prefetch = 0 : i64, scratch_operands = 0 : i64, tpu.core_type = #tpu.core_type<tc>, window_params = [{transform_indices = @transform_0, window_bounds = array<i64: 256, 16>}, {pipeline_mode = #tpu.pipeline_mode<synchronous>, transform_indices = @transform_1, window_bounds = array<i64: 16, 384>}, {pipeline_mode = #tpu.pipeline_mode<synchronous>, transform_indices = @transform_2, window_bounds = array<i64: 1, 384>}, {transform_indices = @transform_3, window_bounds = array<i64: 256, 384>}]} {
    %c0 = arith.constant 0 : index
    %c0_0 = arith.constant 0 : index
    %0 = vector.load %arg1[%c0, %c0_0] : memref<256x16xbf16, #tpu.memory_space<vmem>>, vector<256x16xbf16>
    %c0_1 = arith.constant 0 : index
    %c0_2 = arith.constant 0 : index
    %1 = vector.load %arg2[%c0_1, %c0_2] : memref<16x384xbf16, #tpu.memory_space<vmem>>, vector<16x384xbf16>
    %cst = arith.constant dense<0.000000e+00> : vector<256x384xf32>
    %2 = tpu.matmul %0, %1, %cst {dimension_numbers = #tpu.dot_dimension_numbers<[1], [0], [0], [1], [0, 0, 1, 1], [], []>} : vector<256x16xbf16>, vector<16x384xbf16>, vector<256x384xf32> -> vector<256x384xf32>
    %c0_3 = arith.constant 0 : index
    %c0_4 = arith.constant 0 : index
    %3 = vector.load %arg3[%c0_3, %c0_4] : memref<1x384xf32, #tpu.memory_space<vmem>>, vector<1x384xf32>
    %4 = vector.broadcast %3 : vector<1x384xf32> to vector<256x384xf32>
    %5 = arith.addf %2, %4 : vector<256x384xf32>
    %6 = arith.truncf %5 : vector<256x384xf32> to vector<256x384xbf16>
    %c0_5 = arith.constant 0 : index
    %c0_6 = arith.constant 0 : index
    %7 = vector.load %arg4[%c0_5, %c0_6] : memref<256x384xbf16, #tpu.memory_space<vmem>>, vector<256x384xbf16>
    tpu.vector_store %arg4[%c0_5, %c0_6], %6 {strides = array<i32>} : memref<256x384xbf16, #tpu.memory_space<vmem>>, vector<256x384xbf16>,
    return
  }
  func.func @transform_0(%arg0: i32) -> (i32, i32) {
    %c0_i32 = arith.constant 0 : i32
    %c0_i32_0 = arith.constant 0 : i32
    return %arg0, %c0_i32 : i32, i32
  }
  func.func @transform_1(%arg0: i32) -> (i32, i32) {
    %c0_i32 = arith.constant 0 : i32
    %c0_i32_0 = arith.constant 0 : i32
    %c0_i32_1 = arith.constant 0 : i32
    return %c0_i32, %c0_i32_0 : i32, i32
  }
  func.func @transform_2(%arg0: i32) -> (i32, i32) {
    %c0_i32 = arith.constant 0 : i32
    %c0_i32_0 = arith.constant 0 : i32
    %c0_i32_1 = arith.constant 0 : i32
    return %c0_i32, %c0_i32_0 : i32, i32
  }
  func.func @transform_3(%arg0: i32) -> (i32, i32) {
    %c0_i32 = arith.constant 0 : i32
    %c0_i32_0 = arith.constant 0 : i32
    return %arg0, %c0_i32 : i32, i32
  }
}

</mosaic_0001>

<llo_original>
// kernel: tpu_custom_call.1
$region0: #{tpu_custom_call.1}
  #allocation0 [shape = 'u32[]', space=smem, size = 0x4, offset = 0x4, fixed_abs, tag = 'smem constant byte address 0x4 - core index']
  #allocation1 [shape = 'u32[144,128]{1,0:T(1,128)}', space=vmem, size = 0x12000, scoped, tag = 'internal scratch']
  %s0 = inlined_call_operand.vmem [shape: bf16[256,16], index: 0, kind: input, shape index: {}]
  %s1 = inlined_call_operand.vmem [shape: bf16[16,384], index: 1, kind: input, shape index: {}]
  %s2 = inlined_call_operand.vmem [shape: f32[1,384], index: 2, kind: input, shape index: {}]
  %s3 = inlined_call_operand.hbm [shape: bf16[256,384], index: 3, kind: output, shape index: {}]
  %s4 = sld [smem:[#allocation0]]
  $region22: #{tpu_custom_call.1} parent=0
    _
  %s6 = ssub.s32 1, %s4
  %s7 = scalar_select 0, %s6, %s4
  $region1: #{tpu_custom_call.1} parent=0
    #allocation2 [shape = 'u8[196608]{0}', space=vmem, size = 0x30000, scoped, tag = 'output window, operand 0, single buffered']
    #allocation3 [shape = 's32[1]{0}', space=sflag, size = 0x4, scoped, tag = 'scoped memory for tpu_custom_call.1']
    %8 = vsyncpa [#allocation3], 0
    // Predicated region
    $region2: #{tpu_custom_call.1} parent=1 // pred_check
      _
    $region3: #{tpu_custom_call.1} parent=1 // pred_check_branch
      %10 = sbr.rel (0) target = $region5
    $region4: #{tpu_custom_call.1} parent=1 // pred_region
      _
    $region5: #{tpu_custom_call.1} parent=1 // pred_fallthru
      _
    // Predicated region
    $region6: #{tpu_custom_call.1} parent=1 // pred_check
      _
    $region7: #{tpu_custom_call.1} parent=1 // pred_check_branch
      %12 = sbr.rel (0) target = $region9
    $region8: #{tpu_custom_call.1} parent=1 // pred_region
      _
    $region9: #{tpu_custom_call.1} parent=1 // pred_fallthru
      _
    // Predicated region
    $region10: #{tpu_custom_call.1} parent=1 // pred_check
      _
    $region11: #{tpu_custom_call.1} parent=1 // pred_check_branch
      %14 = sbr.rel (0) target = $region13
    $region12: #{tpu_custom_call.1} parent=1 // pred_region
      _
    $region13: #{tpu_custom_call.1} parent=1 // pred_fallthru
      _
    %v16 = vld [vmem:[%s0] sm:$0xf]
    %v17 = vld [vmem:[%s0 + $0x4] sm:$0xf]
    %v18 = vld [vmem:[%s0 + $0x8] sm:$0xf]
    %v19 = vld [vmem:[%s0 + $0xc] sm:$0xf]
    %v20 = vld [vmem:[%s0 + $0x10] sm:$0xf]
    %v21 = vld [vmem:[%s0 + $0x14] sm:$0xf]
    %v22 = vld [vmem:[%s0 + $0x18] sm:$0xf]
    %v23 = vld [vmem:[%s0 + $0x1c] sm:$0xf]
    %v24 = vld [vmem:[%s0 + $0x20] sm:$0xf]
    %v25 = vld [vmem:[%s0 + $0x24] sm:$0xf]
    %v26 = vld [vmem:[%s0 + $0x28] sm:$0xf]
    %v27 = vld [vmem:[%s0 + $0x2c] sm:$0xf]
    %v28 = vld [vmem:[%s0 + $0x30] sm:$0xf]
    %v29 = vld [vmem:[%s0 + $0x34] sm:$0xf]
    %v30 = vld [vmem:[%s0 + $0x38] sm:$0xf]
    %v31 = vld [vmem:[%s0 + $0x3c] sm:$0xf]
    %v32 = vld [vmem:[%s0 + $0x40] sm:$0xf]
    %v33 = vld [vmem:[%s0 + $0x44] sm:$0xf]
    %v34 = vld [vmem:[%s0 + $0x48] sm:$0xf]
    %v35 = vld [vmem:[%s0 + $0x4c] sm:$0xf]
    %v36 = vld [vmem:[%s0 + $0x50] sm:$0xf]
    %v37 = vld [vmem:[%s0 + $0x54] sm:$0xf]
    %v38 = vld [vmem:[%s0 + $0x58] sm:$0xf]
    %v39 = vld [vmem:[%s0 + $0x5c] sm:$0xf]
    %v40 = vld [vmem:[%s0 + $0x60] sm:$0xf]
    %v41 = vld [vmem:[%s0 + $0x64] sm:$0xf]
    %v42 = vld [vmem:[%s0 + $0x68] sm:$0xf]
    %v43 = vld [vmem:[%s0 + $0x6c] sm:$0xf]
    %v44 = vld [vmem:[%s0 + $0x70] sm:$0xf]
    %v45 = vld [vmem:[%s0 + $0x74] sm:$0xf]
    %v46 = vld [vmem:[%s0 + $0x78] sm:$0xf]
    %v47 = vld [vmem:[%s0 + $0x7c] sm:$0xf]
    %v48 = vld [vmem:[%s1] sm:$0xff]
    %v49 = vld [vmem:[%s1 + $0x8] sm:$0xf]
    %v50 = vld [vmem:[%s1 + $0xc] sm:$0xff]
    %v51 = vld [vmem:[%s1 + $0x14] sm:$0xf]
    %v52 = vld [vmem:[%s2] sm:$0x7]
    %v54 = vlaneseq
    %v55 = vshrl.u32 %v54, 7
    %v56 = vsub.s32 0, %v55
    %v57 = vrot.slane %v52, %v56
    %v58 = vlaneseq
    %v59 = vshrl.u32 %v58, 7
    %v60 = vsub.s32 1, %v59
    %v61 = vrot.slane %v52, %v60
    %v62 = vlaneseq
    %v63 = vshrl.u32 %v62, 7
    %v64 = vsub.s32 2, %v63
    %v65 = vrot.slane %v52, %v64
    %v101 = vunpack.c.l.b16 %v16
    %v102 = vunpack.c.l.b16 %v17
    %v103 = vunpack.c.l.b16 %v18
    %v104 = vunpack.c.l.b16 %v19
    %v105 = vunpack.c.l.b16 %v20
    %v106 = vunpack.c.l.b16 %v21
    %v107 = vunpack.c.l.b16 %v22
    %v108 = vunpack.c.l.b16 %v23
    %v109 = vunpack.c.l.b16 %v24
    %v110 = vunpack.c.l.b16 %v25
    %v111 = vunpack.c.l.b16 %v26
    %v112 = vunpack.c.l.b16 %v27
    %v113 = vunpack.c.l.b16 %v28
    %v114 = vunpack.c.l.b16 %v29
    %v115 = vunpack.c.l.b16 %v30
    %v116 = vunpack.c.l.b16 %v31
    %v117 = vunpack.c.l.b16 %v32
    %v118 = vunpack.c.l.b16 %v33
    %v119 = vunpack.c.l.b16 %v34
    %v120 = vunpack.c.l.b16 %v35
    %v121 = vunpack.c.l.b16 %v36
    %v122 = vunpack.c.l.b16 %v37
    %v123 = vunpack.c.l.b16 %v38
    %v124 = vunpack.c.l.b16 %v39
    %v125 = vunpack.c.l.b16 %v40
    %v126 = vunpack.c.l.b16 %v41
    %v127 = vunpack.c.l.b16 %v42
    %v128 = vunpack.c.l.b16 %v43
    %v129 = vunpack.c.l.b16 %v44
    %v130 = vunpack.c.l.b16 %v45
    %v131 = vunpack.c.l.b16 %v46
    %v132 = vunpack.c.l.b16 %v47
    %v133 = vpack.c.b16 %v102, %v101
    %v134 = vpack.c.b16 %v104, %v103
    %v135 = vpack.c.b16 %v106, %v105
    %v136 = vpack.c.b16 %v108, %v107
    %v137 = vpack.c.b16 %v110, %v109
    %v138 = vpack.c.b16 %v112, %v111
    %v139 = vpack.c.b16 %v114, %v113
    %v140 = vpack.c.b16 %v116, %v115
    %v141 = vpack.c.b16 %v118, %v117
    %v142 = vpack.c.b16 %v120, %v119
    %v143 = vpack.c.b16 %v122, %v121
    %v144 = vpack.c.b16 %v124, %v123
    %v145 = vpack.c.b16 %v126, %v125
    %v146 = vpack.c.b16 %v128, %v127
    %v147 = vpack.c.b16 %v130, %v129
    %v148 = vpack.c.b16 %v132, %v131
    %v153 = vunpack.c.l.b16 %v48
    %v154 = vunpack.c.h.b16 %v48
    %v155 = vunpack.c.l.b16 %v49
    %v156 = vunpack.c.l.b16 %v50
    %v157 = vunpack.c.h.b16 %v50
    %v158 = vunpack.c.l.b16 %v51
    %v159 = vpack.c.b16 %v156, %v153
    %v160 = vpack.c.b16 %v157, %v154
    %v161 = vpack.c.b16 %v158, %v155
    %vm165 = vcmask 130048
    %v167 = vsel %vm165, %v133, 0
    %v170 = vsel %vm165, %v134, 0
    %v173 = vsel %vm165, %v135, 0
    %v176 = vsel %vm165, %v136, 0
    %v179 = vsel %vm165, %v137, 0
    %v182 = vsel %vm165, %v138, 0
    %v185 = vsel %vm165, %v139, 0
    %v188 = vsel %vm165, %v140, 0
    %v191 = vsel %vm165, %v141, 0
    %v194 = vsel %vm165, %v142, 0
    %v197 = vsel %vm165, %v143, 0
    %v200 = vsel %vm165, %v144, 0
    %v203 = vsel %vm165, %v145, 0
    %v206 = vsel %vm165, %v146, 0
    %v209 = vsel %vm165, %v147, 0
    %v212 = vsel %vm165, %v148, 0
    %214 = vmatprep.subr.bf16.mxu0 %v160
    %215 = vmatpush1.bf16.msra.mxu0 %v159
    %216 = vmatprep.subr.bf16.mxu0 0
    %217 = vmatpush1.bf16.msra.mxu0 0
    %218 = vmatprep.subr.bf16.mxu0 0
    %219 = vmatpush1.bf16.msra.mxu0 0
    %220 = vmatprep.subr.bf16.mxu0 0
    %221 = vmatpush1.bf16.msra.mxu0 0
    %222 = vmatprep.subr.bf16.mxu0 0
    %223 = vmatpush1.bf16.msra.mxu0 0
    %224 = vmatprep.subr.bf16.mxu0 0
    %225 = vmatpush1.bf16.msra.mxu0 0
    %226 = vmatprep.subr.bf16.mxu0 0
    %227 = vmatpush1.bf16.msra.mxu0 0
    %228 = vmatprep.subr.bf16.mxu0 0
    %229 = vmatpush1.bf16.msra.mxu0 0
    %230 = vmatprep.subr.bf16.mxu0 0
    %231 = vmatpush1.bf16.msra.mxu0 0
    %232 = vmatprep.subr.bf16.mxu0 0
    %233 = vmatpush1.bf16.msra.mxu0 0
    %234 = vmatprep.subr.bf16.mxu0 0
    %235 = vmatpush1.bf16.msra.mxu0 0
    %236 = vmatprep.subr.bf16.mxu0 0
    %237 = vmatpush1.bf16.msra.mxu0 0
    %238 = vmatprep.subr.bf16.mxu0 0
    %239 = vmatpush1.bf16.msra.mxu0 0
    %240 = vmatprep.subr.bf16.mxu0 0
    %241 = vmatpush1.bf16.msra.mxu0 0
    %242 = vmatprep.subr.bf16.mxu0 0
    %243 = vmatpush1.bf16.msra.mxu0 0
    %244 = vmatprep.subr.bf16.mxu0 0
    %245 = vmatpush1.bf16.msra.mxu0 0
    %246 = vmatprep.mubr.bf16.mxu0 0
    %247 = vmatmul.mubr.bf16.gmra.mrb[0].mxu0 %v167
    %v248 = vpop.f32.mrb[0].mxu0
    %v249 = vadd.f32 %v57, %v248
    %v250 = vpop.f32.mrb[0].mxu0
    %v251 = vadd.f32 %v61, %v250
    %v252 = vpop.f32.mrb[0].mxu0
    %v253 = vadd.f32 %v57, %v252
    %v254 = vpop.f32.mrb[0].mxu0
    %v255 = vadd.f32 %v61, %v254
    %256 = vmatprep.mubr.bf16.mxu0 0
    %257 = vmatmul.mubr.bf16.gmra.mrb[0].mxu0 %v170
    %v258 = vpop.f32.mrb[0].mxu0
    %v259 = vadd.f32 %v57, %v258
    %v260 = vpop.f32.mrb[0].mxu0
    %v261 = vadd.f32 %v61, %v260
    %v262 = vpop.f32.mrb[0].mxu0
    %v263 = vadd.f32 %v57, %v262
    %v264 = vpop.f32.mrb[0].mxu0
    %v265 = vadd.f32 %v61, %v264
    %266 = vmatprep.mubr.bf16.mxu0 0
    %267 = vmatmul.mubr.bf16.gmra.mrb[0].mxu0 %v173
    %v268 = vpop.f32.mrb[0].mxu0
    %v269 = vadd.f32 %v57, %v268
    %v270 = vpop.f32.mrb[0].mxu0
    %v271 = vadd.f32 %v61, %v270
    %v272 = vpop.f32.mrb[0].mxu0
    %v273 = vadd.f32 %v57, %v272
    %v274 = vpop.f32.mrb[0].mxu0
    %v275 = vadd.f32 %v61, %v274
    %276 = vmatprep.mubr.bf16.mxu0 0
    %277 = vmatmul.mubr.bf16.gmra.mrb[0].mxu0 %v176
    %v278 = vpop.f32.mrb[0].mxu0
    %v279 = vadd.f32 %v57, %v278
    %v280 = vpop.f32.mrb[0].mxu0
    %v281 = vadd.f32 %v61, %v280
    %v282 = vpop.f32.mrb[0].mxu0
    %v283 = vadd.f32 %v57, %v282
    %v284 = vpop.f32.mrb[0].mxu0
    %v285 = vadd.f32 %v61, %v284
    %286 = vmatprep.mubr.bf16.mxu0 0
    %287 = vmatmul.mubr.bf16.gmra.mrb[0].mxu0 %v179
    %v288 = vpop.f32.mrb[0].mxu0
    %v289 = vadd.f32 %v57, %v288
    %v290 = vpop.f32.mrb[0].mxu0
    %v291 = vadd.f32 %v61, %v290
    %v292 = vpop.f32.mrb[0].mxu0
    %v293 = vadd.f32 %v57, %v292
    %v294 = vpop.f32.mrb[0].mxu0
    %v295 = vadd.f32 %v61, %v294
    %296 = vmatprep.mubr.bf16.mxu0 0
    %297 = vmatmul.mubr.bf16.gmra.mrb[0].mxu0 %v182
    %v298 = vpop.f32.mrb[0].mxu0
    %v299 = vadd.f32 %v57, %v298
    %v300 = vpop.f32.mrb[0].mxu0
    %v301 = vadd.f32 %v61, %v300
    %v302 = vpop.f32.mrb[0].mxu0
    %v303 = vadd.f32 %v57, %v302
    %v304 = vpop.f32.mrb[0].mxu0
    %v305 = vadd.f32 %v61, %v304
    %306 = vmatprep.mubr.bf16.mxu0 0
    %307 = vmatmul.mubr.bf16.gmra.mrb[0].mxu0 %v185
    %v308 = vpop.f32.mrb[0].mxu0
    %v309 = vadd.f32 %v57, %v308
    %v310 = vpop.f32.mrb[0].mxu0
    %v311 = vadd.f32 %v61, %v310
    %v312 = vpop.f32.mrb[0].mxu0
    %v313 = vadd.f32 %v57, %v312
    %v314 = vpop.f32.mrb[0].mxu0
    %v315 = vadd.f32 %v61, %v314
    %316 = vmatprep.mubr.bf16.mxu0 0
    %317 = vmatmul.mubr.bf16.gmra.mrb[0].mxu0 %v188
    %v318 = vpop.f32.mrb[0].mxu0
    %v319 = vadd.f32 %v57, %v318
    %v320 = vpop.f32.mrb[0].mxu0
    %v321 = vadd.f32 %v61, %v320
    %v322 = vpop.f32.mrb[0].mxu0
    %v323 = vadd.f32 %v57, %v322
    %v324 = vpop.f32.mrb[0].mxu0
    %v325 = vadd.f32 %v61, %v324
    %326 = vmatprep.mubr.bf16.mxu0 0
    %327 = vmatmul.mubr.bf16.gmra.mrb[0].mxu0 %v191
    %v328 = vpop.f32.mrb[0].mxu0
    %v329 = vadd.f32 %v57, %v328
    %v330 = vpop.f32.mrb[0].mxu0
    %v331 = vadd.f32 %v61, %v330
    %v332 = vpop.f32.mrb[0].mxu0
    %v333 = vadd.f32 %v57, %v332
    %v334 = vpop.f32.mrb[0].mxu0
    %v335 = vadd.f32 %v61, %v334
    %336 = vmatprep.mubr.bf16.mxu0 0
    %337 = vmatmul.mubr.bf16.gmra.mrb[0].mxu0 %v194
    %v338 = vpop.f32.mrb[0].mxu0
    %v339 = vadd.f32 %v57, %v338
    %v340 = vpop.f32.mrb[0].mxu0
    %v341 = vadd.f32 %v61, %v340
    %v342 = vpop.f32.mrb[0].mxu0
    %v343 = vadd.f32 %v57, %v342
    %v344 = vpop.f32.mrb[0].mxu0
    %v345 = vadd.f32 %v61, %v344
    %346 = vmatprep.mubr.bf16.mxu0 0
    %347 = vmatmul.mubr.bf16.gmra.mrb[0].mxu0 %v197
    %v348 = vpop.f32.mrb[0].mxu0
    %v349 = vadd.f32 %v57, %v348
    %v350 = vpop.f32.mrb[0].mxu0
    %v351 = vadd.f32 %v61, %v350
    %v352 = vpop.f32.mrb[0].mxu0
    %v353 = vadd.f32 %v57, %v352
    %v354 = vpop.f32.mrb[0].mxu0
    %v355 = vadd.f32 %v61, %v354
    %356 = vmatprep.mubr.bf16.mxu0 0
    %357 = vmatmul.mubr.bf16.gmra.mrb[0].mxu0 %v200
    %v358 = vpop.f32.mrb[0].mxu0
    %v359 = vadd.f32 %v57, %v358
    %v360 = vpop.f32.mrb[0].mxu0
    %v361 = vadd.f32 %v61, %v360
    %v362 = vpop.f32.mrb[0].mxu0
    %v363 = vadd.f32 %v57, %v362
    %v364 = vpop.f32.mrb[0].mxu0
    %v365 = vadd.f32 %v61, %v364
    %366 = vmatprep.mubr.bf16.mxu0 0
    %367 = vmatmul.mubr.bf16.gmra.mrb[0].mxu0 %v203
    %v368 = vpop.f32.mrb[0].mxu0
    %v369 = vadd.f32 %v57, %v368
    %v370 = vpop.f32.mrb[0].mxu0
    %v371 = vadd.f32 %v61, %v370
    %v372 = vpop.f32.mrb[0].mxu0
    %v373 = vadd.f32 %v57, %v372
    %v374 = vpop.f32.mrb[0].mxu0
    %v375 = vadd.f32 %v61, %v374
    %376 = vmatprep.mubr.bf16.mxu0 0
    %377 = vmatmul.mubr.bf16.gmra.mrb[0].mxu0 %v206
    %v378 = vpop.f32.mrb[0].mxu0
    %v379 = vadd.f32 %v57, %v378
    %v380 = vpop.f32.mrb[0].mxu0
    %v381 = vadd.f32 %v61, %v380
    %v382 = vpop.f32.mrb[0].mxu0
    %v383 = vadd.f32 %v57, %v382
    %v384 = vpop.f32.mrb[0].mxu0
    %v385 = vadd.f32 %v61, %v384
    %386 = vmatprep.mubr.bf16.mxu0 0
    %387 = vmatmul.mubr.bf16.gmra.mrb[0].mxu0 %v209
    %v388 = vpop.f32.mrb[0].mxu0
    %v389 = vadd.f32 %v57, %v388
    %v390 = vpop.f32.mrb[0].mxu0
    %v391 = vadd.f32 %v61, %v390
    %v392 = vpop.f32.mrb[0].mxu0
    %v393 = vadd.f32 %v57, %v392
    %v394 = vpop.f32.mrb[0].mxu0
    %v395 = vadd.f32 %v61, %v394
    %396 = vmatprep.mubr.bf16.mxu0 0
    %397 = vmatmul.mubr.bf16.gmra.mrb[0].mxu0 %v212
    %v398 = vpop.f32.mrb[0].mxu0
    %v399 = vadd.f32 %v57, %v398
    %v400 = vpop.f32.mrb[0].mxu0
    %v401 = vadd.f32 %v61, %v400
    %v402 = vpop.f32.mrb[0].mxu0
    %v403 = vadd.f32 %v57, %v402
    %v404 = vpop.f32.mrb[0].mxu0
    %v405 = vadd.f32 %v61, %v404
    %406 = vdwg.mxu0
    %407 = vmatprep.subr.bf16.mxu0 0
    %408 = vmatpush1.bf16.msra.mxu0 %v161
    %409 = vmatprep.subr.bf16.mxu0 0
    %410 = vmatpush1.bf16.msra.mxu0 0
    %411 = vmatprep.subr.bf16.mxu0 0
    %412 = vmatpush1.bf16.msra.mxu0 0
    %413 = vmatprep.subr.bf16.mxu0 0
    %414 = vmatpush1.bf16.msra.mxu0 0
    %415 = vmatprep.subr.bf16.mxu0 0
    %416 = vmatpush1.bf16.msra.mxu0 0
    %417 = vmatprep.subr.bf16.mxu0 0
    %418 = vmatpush1.bf16.msra.mxu0 0
    %419 = vmatprep.subr.bf16.mxu0 0
    %420 = vmatpush1.bf16.msra.mxu0 0
    %421 = vmatprep.subr.bf16.mxu0 0
    %422 = vmatpush1.bf16.msra.mxu0 0
    %423 = vmatprep.subr.bf16.mxu0 0
    %424 = vmatpush1.bf16.msra.mxu0 0
    %425 = vmatprep.subr.bf16.mxu0 0
    %426 = vmatpush1.bf16.msra.mxu0 0
    %427 = vmatprep.subr.bf16.mxu0 0
    %428 = vmatpush1.bf16.msra.mxu0 0
    %429 = vmatprep.subr.bf16.mxu0 0
    %430 = vmatpush1.bf16.msra.mxu0 0
    %431 = vmatprep.subr.bf16.mxu0 0
    %432 = vmatpush1.bf16.msra.mxu0 0
    %433 = vmatprep.subr.bf16.mxu0 0
    %434 = vmatpush1.bf16.msra.mxu0 0
    %435 = vmatprep.subr.bf16.mxu0 0
    %436 = vmatpush1.bf16.msra.mxu0 0
    %437 = vmatprep.subr.bf16.mxu0 0
    %438 = vmatpush1.bf16.msra.mxu0 0
    %439 = vmatprep.mubr.bf16.mxu0 0
    %440 = vmatmul.mubr.bf16.gmra.mrb[0].mxu0 %v167
    %v441 = vpop.f32.mrb[0].mxu0
    %v442 = vadd.f32 %v65, %v441
    %v443 = vpop.f32.mrb[0].mxu0
    %v444 = vpop.f32.mrb[0].mxu0
    %v445 = vadd.f32 %v65, %v444
    %v446 = vpop.f32.mrb[0].mxu0
    %447 = vmatprep.mubr.bf16.mxu0 0
    %448 = vmatmul.mubr.bf16.gmra.mrb[0].mxu0 %v170
    %v449 = vpop.f32.mrb[0].mxu0
    %v450 = vadd.f32 %v65, %v449
    %v451 = vpop.f32.mrb[0].mxu0
    %v452 = vpop.f32.mrb[0].mxu0
    %v453 = vadd.f32 %v65, %v452
    %v454 = vpop.f32.mrb[0].mxu0
    %455 = vmatprep.mubr.bf16.mxu0 0
    %456 = vmatmul.mubr.bf16.gmra.mrb[0].mxu0 %v173
    %v457 = vpop.f32.mrb[0].mxu0
    %v458 = vadd.f32 %v65, %v457
    %v459 = vpop.f32.mrb[0].mxu0
    %v460 = vpop.f32.mrb[0].mxu0
    %v461 = vadd.f32 %v65, %v460
    %v462 = vpop.f32.mrb[0].mxu0
    %463 = vmatprep.mubr.bf16.mxu0 0
    %464 = vmatmul.mubr.bf16.gmra.mrb[0].mxu0 %v176
    %v465 = vpop.f32.mrb[0].mxu0
    %v466 = vadd.f32 %v65, %v465
    %v467 = vpop.f32.mrb[0].mxu0
    %v468 = vpop.f32.mrb[0].mxu0
    %v469 = vadd.f32 %v65, %v468
    %v470 = vpop.f32.mrb[0].mxu0
    %471 = vmatprep.mubr.bf16.mxu0 0
    %472 = vmatmul.mubr.bf16.gmra.mrb[0].mxu0 %v179
    %v473 = vpop.f32.mrb[0].mxu0
    %v474 = vadd.f32 %v65, %v473
    %v475 = vpop.f32.mrb[0].mxu0
    %v476 = vpop.f32.mrb[0].mxu0
    %v477 = vadd.f32 %v65, %v476
    %v478 = vpop.f32.mrb[0].mxu0
    %479 = vmatprep.mubr.bf16.mxu0 0
    %480 = vmatmul.mubr.bf16.gmra.mrb[0].mxu0 %v182
    %v481 = vpop.f32.mrb[0].mxu0
    %v482 = vadd.f32 %v65, %v481
    %v483 = vpop.f32.mrb[0].mxu0
    %v484 = vpop.f32.mrb[0].mxu0
    %v485 = vadd.f32 %v65, %v484
    %v486 = vpop.f32.mrb[0].mxu0
    %487 = vmatprep.mubr.bf16.mxu0 0
    %488 = vmatmul.mubr.bf16.gmra.mrb[0].mxu0 %v185
    %v489 = vpop.f32.mrb[0].mxu0
    %v490 = vadd.f32 %v65, %v489
    %v491 = vpop.f32.mrb[0].mxu0
    %v492 = vpop.f32.mrb[0].mxu0
    %v493 = vadd.f32 %v65, %v492
    %v494 = vpop.f32.mrb[0].mxu0
    %495 = vmatprep.mubr.bf16.mxu0 0
    %496 = vmatmul.mubr.bf16.gmra.mrb[0].mxu0 %v188
    %v497 = vpop.f32.mrb[0].mxu0
    %v498 = vadd.f32 %v65, %v497
    %v499 = vpop.f32.mrb[0].mxu0
    %v500 = vpop.f32.mrb[0].mxu0
    %v501 = vadd.f32 %v65, %v500
    %v502 = vpop.f32.mrb[0].mxu0
    %503 = vmatprep.mubr.bf16.mxu0 0
    %504 = vmatmul.mubr.bf16.gmra.mrb[0].mxu0 %v191
    %v505 = vpop.f32.mrb[0].mxu0
    %v506 = vadd.f32 %v65, %v505
    %v507 = vpop.f32.mrb[0].mxu0
    %v508 = vpop.f32.mrb[0].mxu0
    %v509 = vadd.f32 %v65, %v508
    %v510 = vpop.f32.mrb[0].mxu0
    %511 = vmatprep.mubr.bf16.mxu0 0
    %512 = vmatmul.mubr.bf16.gmra.mrb[0].mxu0 %v194
    %v513 = vpop.f32.mrb[0].mxu0
    %v514 = vadd.f32 %v65, %v513
    %v515 = vpop.f32.mrb[0].mxu0
    %v516 = vpop.f32.mrb[0].mxu0
    %v517 = vadd.f32 %v65, %v516
    %v518 = vpop.f32.mrb[0].mxu0
    %519 = vmatprep.mubr.bf16.mxu0 0
    %520 = vmatmul.mubr.bf16.gmra.mrb[0].mxu0 %v197
    %v521 = vpop.f32.mrb[0].mxu0
    %v522 = vadd.f32 %v65, %v521
    %v523 = vpop.f32.mrb[0].mxu0
    %v524 = vpop.f32.mrb[0].mxu0
    %v525 = vadd.f32 %v65, %v524
    %v526 = vpop.f32.mrb[0].mxu0
    %527 = vmatprep.mubr.bf16.mxu0 0
    %528 = vmatmul.mubr.bf16.gmra.mrb[0].mxu0 %v200
    %v529 = vpop.f32.mrb[0].mxu0
    %v530 = vadd.f32 %v65, %v529
    %v531 = vpop.f32.mrb[0].mxu0
    %v532 = vpop.f32.mrb[0].mxu0
    %v533 = vadd.f32 %v65, %v532
    %v534 = vpop.f32.mrb[0].mxu0
    %535 = vmatprep.mubr.bf16.mxu0 0
    %536 = vmatmul.mubr.bf16.gmra.mrb[0].mxu0 %v203
    %v537 = vpop.f32.mrb[0].mxu0
    %v538 = vadd.f32 %v65, %v537
    %v539 = vpop.f32.mrb[0].mxu0
    %v540 = vpop.f32.mrb[0].mxu0
    %v541 = vadd.f32 %v65, %v540
    %v542 = vpop.f32.mrb[0].mxu0
    %543 = vmatprep.mubr.bf16.mxu0 0
    %544 = vmatmul.mubr.bf16.gmra.mrb[0].mxu0 %v206
    %v545 = vpop.f32.mrb[0].mxu0
    %v546 = vadd.f32 %v65, %v545
    %v547 = vpop.f32.mrb[0].mxu0
    %v548 = vpop.f32.mrb[0].mxu0
    %v549 = vadd.f32 %v65, %v548
    %v550 = vpop.f32.mrb[0].mxu0
    %551 = vmatprep.mubr.bf16.mxu0 0
    %552 = vmatmul.mubr.bf16.gmra.mrb[0].mxu0 %v209
    %v553 = vpop.f32.mrb[0].mxu0
    %v554 = vadd.f32 %v65, %v553
    %v555 = vpop.f32.mrb[0].mxu0
    %v556 = vpop.f32.mrb[0].mxu0
    %v557 = vadd.f32 %v65, %v556
    %v558 = vpop.f32.mrb[0].mxu0
    %559 = vmatprep.mubr.bf16.mxu0 0
    %560 = vmatmul.mubr.bf16.gmra.mrb[0].mxu0 %v212
    %v561 = vpop.f32.mrb[0].mxu0
    %v562 = vadd.f32 %v65, %v561
    %v563 = vpop.f32.mrb[0].mxu0
    %v564 = vpop.f32.mrb[0].mxu0
    %v565 = vadd.f32 %v65, %v564
    %v566 = vpop.f32.mrb[0].mxu0
    %567 = vdwg.mxu0
    %v568 = vpack.c.bf16 %v253, %v249
    %v569 = vpack.c.bf16 %v255, %v251
    %v570 = vpack.c.bf16 %v445, %v442
    %v571 = vpack.c.bf16 %v263, %v259
    %v572 = vpack.c.bf16 %v265, %v261
    %v573 = vpack.c.bf16 %v453, %v450
    %v574 = vpack.c.bf16 %v273, %v269
    %v575 = vpack.c.bf16 %v275, %v271
    %v576 = vpack.c.bf16 %v461, %v458
    %v577 = vpack.c.bf16 %v283, %v279
    %v578 = vpack.c.bf16 %v285, %v281
    %v579 = vpack.c.bf16 %v469, %v466
    %v580 = vpack.c.bf16 %v293, %v289
    %v581 = vpack.c.bf16 %v295, %v291
    %v582 = vpack.c.bf16 %v477, %v474
    %v583 = vpack.c.bf16 %v303, %v299
    %v584 = vpack.c.bf16 %v305, %v301
    %v585 = vpack.c.bf16 %v485, %v482
    %v586 = vpack.c.bf16 %v313, %v309
    %v587 = vpack.c.bf16 %v315, %v311
    %v588 = vpack.c.bf16 %v493, %v490
    %v589 = vpack.c.bf16 %v323, %v319
    %v590 = vpack.c.bf16 %v325, %v321
    %v591 = vpack.c.bf16 %v501, %v498
    %v592 = vpack.c.bf16 %v333, %v329
    %v593 = vpack.c.bf16 %v335, %v331
    %v594 = vpack.c.bf16 %v509, %v506
    %v595 = vpack.c.bf16 %v343, %v339
    %v596 = vpack.c.bf16 %v345, %v341
    %v597 = vpack.c.bf16 %v517, %v514
    %v598 = vpack.c.bf16 %v353, %v349
    %v599 = vpack.c.bf16 %v355, %v351
    %v600 = vpack.c.bf16 %v525, %v522
    %v601 = vpack.c.bf16 %v363, %v359
    %v602 = vpack.c.bf16 %v365, %v361
    %v603 = vpack.c.bf16 %v533, %v530
    %v604 = vpack.c.bf16 %v373, %v369
    %v605 = vpack.c.bf16 %v375, %v371
    %v606 = vpack.c.bf16 %v541, %v538
    %v607 = vpack.c.bf16 %v383, %v379
    %v608 = vpack.c.bf16 %v385, %v381
    %v609 = vpack.c.bf16 %v549, %v546
    %v610 = vpack.c.bf16 %v393, %v389
    %v611 = vpack.c.bf16 %v395, %v391
    %v612 = vpack.c.bf16 %v557, %v554
    %v613 = vpack.c.bf16 %v403, %v399
    %v614 = vpack.c.bf16 %v405, %v401
    %v615 = vpack.c.bf16 %v565, %v562
    %v664 = vunpack.c.l.b16 %v568
    %v665 = vunpack.c.l.b16 %v569
    %v666 = vunpack.c.l.b16 %v570
    %v667 = vunpack.c.h.b16 %v568
    %v668 = vunpack.c.h.b16 %v569
    %v669 = vunpack.c.h.b16 %v570
    %v670 = vunpack.c.l.b16 %v571
    %v671 = vunpack.c.l.b16 %v572
    %v672 = vunpack.c.l.b16 %v573
    %v673 = vunpack.c.h.b16 %v571
    %v674 = vunpack.c.h.b16 %v572
    %v675 = vunpack.c.h.b16 %v573
    %v676 = vunpack.c.l.b16 %v574
    %v677 = vunpack.c.l.b16 %v575
    %v678 = vunpack.c.l.b16 %v576
    %v679 = vunpack.c.h.b16 %v574
    %v680 = vunpack.c.h.b16 %v575
    %v681 = vunpack.c.h.b16 %v576
    %v682 = vunpack.c.l.b16 %v577
    %v683 = vunpack.c.l.b16 %v578
    %v684 = vunpack.c.l.b16 %v579
    %v685 = vunpack.c.h.b16 %v577
    %v686 = vunpack.c.h.b16 %v578
    %v687 = vunpack.c.h.b16 %v579
    %v688 = vunpack.c.l.b16 %v580
    %v689 = vunpack.c.l.b16 %v581
    %v690 = vunpack.c.l.b16 %v582
    %v691 = vunpack.c.h.b16 %v580
    %v692 = vunpack.c.h.b16 %v581
    %v693 = vunpack.c.h.b16 %v582
    %v694 = vunpack.c.l.b16 %v583
    %v695 = vunpack.c.l.b16 %v584
    %v696 = vunpack.c.l.b16 %v585
    %v697 = vunpack.c.h.b16 %v583
    %v698 = vunpack.c.h.b16 %v584
    %v699 = vunpack.c.h.b16 %v585
    %v700 = vunpack.c.l.b16 %v586
    %v701 = vunpack.c.l.b16 %v587
    %v702 = vunpack.c.l.b16 %v588
    %v703 = vunpack.c.h.b16 %v586
    %v704 = vunpack.c.h.b16 %v587
    %v705 = vunpack.c.h.b16 %v588
    %v706 = vunpack.c.l.b16 %v589
    %v707 = vunpack.c.l.b16 %v590
    %v708 = vunpack.c.l.b16 %v591
    %v709 = vunpack.c.h.b16 %v589
    %v710 = vunpack.c.h.b16 %v590
    %v711 = vunpack.c.h.b16 %v591
    %v712 = vunpack.c.l.b16 %v592
    %v713 = vunpack.c.l.b16 %v593
    %v714 = vunpack.c.l.b16 %v594
    %v715 = vunpack.c.h.b16 %v592
    %v716 = vunpack.c.h.b16 %v593
    %v717 = vunpack.c.h.b16 %v594
    %v718 = vunpack.c.l.b16 %v595
    %v719 = vunpack.c.l.b16 %v596
    %v720 = vunpack.c.l.b16 %v597
    %v721 = vunpack.c.h.b16 %v595
    %v722 = vunpack.c.h.b16 %v596
    %v723 = vunpack.c.h.b16 %v597
    %v724 = vunpack.c.l.b16 %v598
    %v725 = vunpack.c.l.b16 %v599
    %v726 = vunpack.c.l.b16 %v600
    %v727 = vunpack.c.h.b16 %v598
    %v728 = vunpack.c.h.b16 %v599
    %v729 = vunpack.c.h.b16 %v600
    %v730 = vunpack.c.l.b16 %v601
    %v731 = vunpack.c.l.b16 %v602
    %v732 = vunpack.c.l.b16 %v603
    %v733 = vunpack.c.h.b16 %v601
    %v734 = vunpack.c.h.b16 %v602
    %v735 = vunpack.c.h.b16 %v603
    %v736 = vunpack.c.l.b16 %v604
    %v737 = vunpack.c.l.b16 %v605
    %v738 = vunpack.c.l.b16 %v606
    %v739 = vunpack.c.h.b16 %v604
    %v740 = vunpack.c.h.b16 %v605
    %v741 = vunpack.c.h.b16 %v606
    %v742 = vunpack.c.l.b16 %v607
    %v743 = vunpack.c.l.b16 %v608
    %v744 = vunpack.c.l.b16 %v609
    %v745 = vunpack.c.h.b16 %v607
    %v746 = vunpack.c.h.b16 %v608
    %v747 = vunpack.c.h.b16 %v609
    %v748 = vunpack.c.l.b16 %v610
    %v749 = vunpack.c.l.b16 %v611
    %v750 = vunpack.c.l.b16 %v612
    %v751 = vunpack.c.h.b16 %v610
    %v752 = vunpack.c.h.b16 %v611
    %v753 = vunpack.c.h.b16 %v612
    %v754 = vunpack.c.l.b16 %v613
    %v755 = vunpack.c.l.b16 %v614
    %v756 = vunpack.c.l.b16 %v615
    %v757 = vunpack.c.h.b16 %v613
    %v758 = vunpack.c.h.b16 %v614
    %v759 = vunpack.c.h.b16 %v615
    %v760 = vpack.c.b16 %v665, %v664
    %v761 = vpack.c.b16 %v666, %v666
    %v762 = vpack.c.b16 %v668, %v667
    %v763 = vpack.c.b16 %v669, %v669
    %v764 = vpack.c.b16 %v671, %v670
    %v765 = vpack.c.b16 %v672, %v672
    %v766 = vpack.c.b16 %v674, %v673
    %v767 = vpack.c.b16 %v675, %v675
    %v768 = vpack.c.b16 %v677, %v676
    %v769 = vpack.c.b16 %v678, %v678
    %v770 = vpack.c.b16 %v680, %v679
    %v771 = vpack.c.b16 %v681, %v681
    %v772 = vpack.c.b16 %v683, %v682
    %v773 = vpack.c.b16 %v684, %v684
    %v774 = vpack.c.b16 %v686, %v685
    %v775 = vpack.c.b16 %v687, %v687
    %v776 = vpack.c.b16 %v689, %v688
    %v777 = vpack.c.b16 %v690, %v690
    %v778 = vpack.c.b16 %v692, %v691
    %v779 = vpack.c.b16 %v693, %v693
    %v780 = vpack.c.b16 %v695, %v694
    %v781 = vpack.c.b16 %v696, %v696
    %v782 = vpack.c.b16 %v698, %v697
    %v783 = vpack.c.b16 %v699, %v699
    %v784 = vpack.c.b16 %v701, %v700
    %v785 = vpack.c.b16 %v702, %v702
    %v786 = vpack.c.b16 %v704, %v703
    %v787 = vpack.c.b16 %v705, %v705
    %v788 = vpack.c.b16 %v707, %v706
    %v789 = vpack.c.b16 %v708, %v708
    %v790 = vpack.c.b16 %v710, %v709
    %v791 = vpack.c.b16 %v711, %v711
    %v792 = vpack.c.b16 %v713, %v712
    %v793 = vpack.c.b16 %v714, %v714
    %v794 = vpack.c.b16 %v716, %v715
    %v795 = vpack.c.b16 %v717, %v717
    %v796 = vpack.c.b16 %v719, %v718
    %v797 = vpack.c.b16 %v720, %v720
    %v798 = vpack.c.b16 %v722, %v721
    %v799 = vpack.c.b16 %v723, %v723
    %v800 = vpack.c.b16 %v725, %v724
    %v801 = vpack.c.b16 %v726, %v726
    %v802 = vpack.c.b16 %v728, %v727
    %v803 = vpack.c.b16 %v729, %v729
    %v804 = vpack.c.b16 %v731, %v730
    %v805 = vpack.c.b16 %v732, %v732
    %v806 = vpack.c.b16 %v734, %v733
    %v807 = vpack.c.b16 %v735, %v735
    %v808 = vpack.c.b16 %v737, %v736
    %v809 = vpack.c.b16 %v738, %v738
    %v810 = vpack.c.b16 %v740, %v739
    %v811 = vpack.c.b16 %v741, %v741
    %v812 = vpack.c.b16 %v743, %v742
    %v813 = vpack.c.b16 %v744, %v744
    %v814 = vpack.c.b16 %v746, %v745
    %v815 = vpack.c.b16 %v747, %v747
    %v816 = vpack.c.b16 %v749, %v748
    %v817 = vpack.c.b16 %v750, %v750
    %v818 = vpack.c.b16 %v752, %v751
    %v819 = vpack.c.b16 %v753, %v753
    %v820 = vpack.c.b16 %v755, %v754
    %v821 = vpack.c.b16 %v756, %v756
    %v822 = vpack.c.b16 %v758, %v757
    %v823 = vpack.c.b16 %v759, %v759
    %888 = vst [vmem:[#allocation2] sm:$0xff] %v760
    %889 = vst [vmem:[#allocation2 + $0x8] sm:$0xf] %v761
    %890 = vst [vmem:[#allocation2 + $0xc] sm:$0xff] %v762
    %891 = vst [vmem:[#allocation2 + $0x14] sm:$0xf] %v763
    %892 = vst [vmem:[#allocation2 + $0x18] sm:$0xff] %v764
    %893 = vst [vmem:[#allocation2 + $0x20] sm:$0xf] %v765
    %894 = vst [vmem:[#allocation2 + $0x24] sm:$0xff] %v766
    %895 = vst [vmem:[#allocation2 + $0x2c] sm:$0xf] %v767
    %896 = vst [vmem:[#allocation2 + $0x30] sm:$0xff] %v768
    %897 = vst [vmem:[#allocation2 + $0x38] sm:$0xf] %v769
    %898 = vst [vmem:[#allocation2 + $0x3c] sm:$0xff] %v770
    %899 = vst [vmem:[#allocation2 + $0x44] sm:$0xf] %v771
    %900 = vst [vmem:[#allocation2 + $0x48] sm:$0xff] %v772
    %901 = vst [vmem:[#allocation2 + $0x50] sm:$0xf] %v773
    %902 = vst [vmem:[#allocation2 + $0x54] sm:$0xff] %v774
    %903 = vst [vmem:[#allocation2 + $0x5c] sm:$0xf] %v775
    %904 = vst [vmem:[#allocation2 + $0x60] sm:$0xff] %v776
    %905 = vst [vmem:[#allocation2 + $0x68] sm:$0xf] %v777
    %906 = vst [vmem:[#allocation2 + $0x6c] sm:$0xff] %v778
    %907 = vst [vmem:[#allocation2 + $0x74] sm:$0xf] %v779
    %908 = vst [vmem:[#allocation2 + $0x78] sm:$0xff] %v780
    %909 = vst [vmem:[#allocation2 + $0x80] sm:$0xf] %v781
    %910 = vst [vmem:[#allocation2 + $0x84] sm:$0xff] %v782
    %911 = vst [vmem:[#allocation2 + $0x8c] sm:$0xf] %v783
    %912 = vst [vmem:[#allocation2 + $0x90] sm:$0xff] %v784
    %913 = vst [vmem:[#allocation2 + $0x98] sm:$0xf] %v785
    %914 = vst [vmem:[#allocation2 + $0x9c] sm:$0xff] %v786
    %915 = vst [vmem:[#allocation2 + $0xa4] sm:$0xf] %v787
    %916 = vst [vmem:[#allocation2 + $0xa8] sm:$0xff] %v788
    %917 = vst [vmem:[#allocation2 + $0xb0] sm:$0xf] %v789
    %918 = vst [vmem:[#allocation2 + $0xb4] sm:$0xff] %v790
    %919 = vst [vmem:[#allocation2 + $0xbc] sm:$0xf] %v791
    %920 = vst [vmem:[#allocation2 + $0xc0] sm:$0xff] %v792
    %921 = vst [vmem:[#allocation2 + $0xc8] sm:$0xf] %v793
    %922 = vst [vmem:[#allocation2 + $0xcc] sm:$0xff] %v794
    %923 = vst [vmem:[#allocation2 + $0xd4] sm:$0xf] %v795
    %924 = vst [vmem:[#allocation2 + $0xd8] sm:$0xff] %v796
    %925 = vst [vmem:[#allocation2 + $0xe0] sm:$0xf] %v797
    %926 = vst [vmem:[#allocation2 + $0xe4] sm:$0xff] %v798
    %927 = vst [vmem:[#allocation2 + $0xec] sm:$0xf] %v799
    %928 = vst [vmem:[#allocation2 + $0xf0] sm:$0xff] %v800
    %929 = vst [vmem:[#allocation2 + $0xf8] sm:$0xf] %v801
    %930 = vst [vmem:[#allocation2 + $0xfc] sm:$0xff] %v802
    %931 = vst [vmem:[#allocation2 + $0x104] sm:$0xf] %v803
    %932 = vst [vmem:[#allocation2 + $0x108] sm:$0xff] %v804
    %933 = vst [vmem:[#allocation2 + $0x110] sm:$0xf] %v805
    %934 = vst [vmem:[#allocation2 + $0x114] sm:$0xff] %v806
    %935 = vst [vmem:[#allocation2 + $0x11c] sm:$0xf] %v807
    %936 = vst [vmem:[#allocation2 + $0x120] sm:$0xff] %v808
    %937 = vst [vmem:[#allocation2 + $0x128] sm:$0xf] %v809
    %938 = vst [vmem:[#allocation2 + $0x12c] sm:$0xff] %v810
    %939 = vst [vmem:[#allocation2 + $0x134] sm:$0xf] %v811
    %940 = vst [vmem:[#allocation2 + $0x138] sm:$0xff] %v812
    %941 = vst [vmem:[#allocation2 + $0x140] sm:$0xf] %v813
    %942 = vst [vmem:[#allocation2 + $0x144] sm:$0xff] %v814
    %943 = vst [vmem:[#allocation2 + $0x14c] sm:$0xf] %v815
    %944 = vst [vmem:[#allocation2 + $0x150] sm:$0xff] %v816
    %945 = vst [vmem:[#allocation2 + $0x158] sm:$0xf] %v817
    %946 = vst [vmem:[#allocation2 + $0x15c] sm:$0xff] %v818
    %947 = vst [vmem:[#allocation2 + $0x164] sm:$0xf] %v819
    %948 = vst [vmem:[#allocation2 + $0x168] sm:$0xff] %v820
    %949 = vst [vmem:[#allocation2 + $0x170] sm:$0xf] %v821
    %950 = vst [vmem:[#allocation2 + $0x174] sm:$0xff] %v822
    %951 = vst [vmem:[#allocation2 + $0x17c] sm:$0xf] %v823
    // Predicated region
    $region14: #{tpu_custom_call.1} parent=1 // pred_check
      _
    $region15: #{tpu_custom_call.1} parent=1 // pred_check_branch
      %953 = sbr.rel (0) target = $region17
    $region16: #{tpu_custom_call.1} parent=1 // pred_region
      %s955 = ssub.s32 6144, 6144
      %956 = vsyncadd [#allocation3], %s955
      %s957 = sshll.u32 [#allocation2], 4
      %s958 = int_to_ptr.vmem [resolvable:$true] %s957
      %963 = dma.vmem_to_hbm [thread:$0]  %s958, 6144, %s3, [#allocation3], 192, 192, 12
    $region17: #{tpu_custom_call.1} parent=1 // pred_fallthru
      _
    // Predicated region
    $region18: #{tpu_custom_call.1} parent=1 // pred_check
      _
    $region19: #{tpu_custom_call.1} parent=1 // pred_check_branch
      %965 = sbr.rel (0) target = $region21
    $region20: #{tpu_custom_call.1} parent=1 // pred_region
      %966 = dma.done [#allocation3], 6144
    $region21: #{tpu_custom_call.1} parent=1 // pred_fallthru
      _
    %967 = vsyncpa [#allocation3], 1

</llo_original>
